<compile_context>
chip_gen: v7x
topology: tpu7x:2x2x1
jax: 0.10.0
libtpu: 0.0.40
codegen_flags: <defaults>
</compile_context>

<pallas_src>
import functools

import jax
import jax.numpy as jnp
from jax.experimental import pallas as pl
from jax.experimental.pallas import tpu as pltpu

# ---- small, module-consistent shapes (Config: dim_model=6, num_head=2) -------
B = 2              # batch
S = 8              # sequence length (small pad_size analogue)
DIM_MODEL = 6      # dim_model
NUM_HEAD = 2
DIM_HEAD = DIM_MODEL // NUM_HEAD
EPS = 1e-5         # nn.LayerNorm default eps


def _full_spec(shape):
    """BlockSpec covering an entire (replicated) parameter array."""
    nd = len(shape)
    return pl.BlockSpec(shape, lambda *_: (0,) * nd)


# ------------------------------------------------------------------------------
# Fused kernel: QKV projection + "buggy view" head attention + output
# projection + residual + LayerNorm, one batch element per grid step.
# ------------------------------------------------------------------------------
def mha_kernel(x_ref, wqkv_ref, bqkv_ref, wo_ref, bo_ref, g_ref, be_ref,
               y_ref, qg_ref, kg_ref, vg_ref, ctx_ref, *, num_head, scale):
    Sq, D = x_ref.shape
    H = num_head
    dh = D // H
    Sh = Sq // H

    x = x_ref[...]                                                   # (S, D)

    # Single fused QKV projection: one MXU matmul instead of three.
    qkv = jnp.dot(x, wqkv_ref[...],
                  preferred_element_type=jnp.float32) + bqkv_ref[...]  # (S, 3D)
    q = qkv[:, 0:D]
    k = qkv[:, D:2 * D]
    v = qkv[:, 2 * D:3 * D]

    # PyTorch's `Q.view(B*H, -1, dh)`: head h of this batch element is the
    # contiguous row block rows [h*Sh,(h+1)*Sh), reinterpreted as an (S, dh)
    # matrix by walking its dh-wide column slices.  We work on a block-order
    # permutation of that view (column slice `a` -> rows [a*Sh,(a+1)*Sh)):
    # softmax(P M P^T) = P softmax(M) P^T, so applying the same permutation
    # to Q/K/V rows and undoing it on the context gives identical results.
    for h in range(H):
        r0 = h * Sh
        # Reorder into block-order group matrices via static-slice scratch
        # stores (avoids in-kernel reshapes/concats of tiny unaligned tiles).
        for a in range(H):
            c0 = a * dh
            g0 = a * Sh
            qg_ref[g0:g0 + Sh, :] = q[r0:r0 + Sh, c0:c0 + dh]
            kg_ref[g0:g0 + Sh, :] = k[r0:r0 + Sh, c0:c0 + dh]
            vg_ref[g0:g0 + Sh, :] = v[r0:r0 + Sh, c0:c0 + dh]

        qg = qg_ref[...]                                             # (S, dh)
        kg = kg_ref[...]
        vg = vg_ref[...]

        # One score matmul per head (contract last dims, no .T), stable softmax.
        s = jax.lax.dot_general(qg, kg, (((1,), (1,)), ((), ())),
                                preferred_element_type=jnp.float32) * scale
        m = jnp.max(s, axis=-1, keepdims=True)
        e = jnp.exp(s - m)
        l = jnp.sum(e, axis=-1, keepdims=True)
        p = e * pl.reciprocal(l, approx=True)
        cg = jnp.dot(p, vg, preferred_element_type=jnp.float32)      # (S, dh)

        # Un-permute: block-order rows [a*Sh,(a+1)*Sh) are the dh-wide column
        # slice `a` of this head's (Sh, D) merged-context block.
        for a in range(H):
            ctx_ref[r0:r0 + Sh, a * dh:(a + 1) * dh] = cg[a * Sh:(a + 1) * Sh, :]

    # fc + dropout(identity) + residual + LayerNorm, then one full-tile store.
    out = jnp.dot(ctx_ref[...], wo_ref[...],
                  preferred_element_type=jnp.float32) + bo_ref[...] + x
    mu = jnp.mean(out, axis=-1, keepdims=True)
    var = jnp.mean((out - mu) ** 2, axis=-1, keepdims=True)
    y_ref[...] = (out - mu) * jax.lax.rsqrt(var + EPS) * g_ref[...] + be_ref[...]
    # TODO(synk): dropout is identity here (eval-mode / dropout=0.0 semantics).


def mha_forward(x, p):
    b_, s_, d_ = x.shape
    assert d_ % NUM_HEAD == 0
    # The block decomposition above assumes head boundaries fall on whole rows
    # (true whenever S % num_head == 0; holds for this demo shape).
    assert s_ % NUM_HEAD == 0
    dh = d_ // NUM_HEAD

    wqkv = jnp.concatenate([p["wq"], p["wk"], p["wv"]], axis=1)      # (D, 3D)
    bqkv = jnp.concatenate([p["bq"], p["bk"], p["bv"]], axis=1)      # (1, 3D)
    scale = dh ** (-0.5)

    xspec = pl.BlockSpec((None, s_, d_), lambda b: (b, 0, 0))
    kernel = functools.partial(mha_kernel, num_head=NUM_HEAD, scale=scale)

    return pl.pallas_call(
        kernel,
        grid=(b_,),
        in_specs=[xspec,
                  _full_spec(wqkv.shape), _full_spec(bqkv.shape),
                  _full_spec(p["wo"].shape), _full_spec(p["bo"].shape),
                  _full_spec(p["g"].shape), _full_spec(p["be"].shape)],
        out_specs=xspec,
        out_shape=jax.ShapeDtypeStruct(x.shape, jnp.float32),
        scratch_shapes=[pltpu.VMEM((s_, dh), jnp.float32),   # q (block order)
                        pltpu.VMEM((s_, dh), jnp.float32),   # k (block order)
                        pltpu.VMEM((s_, dh), jnp.float32),   # v (block order)
                        pltpu.VMEM((s_, d_), jnp.float32)],  # merged context
        compiler_params=pltpu.CompilerParams(dimension_semantics=("parallel",)),
    )(x, wqkv, bqkv, p["wo"], p["bo"], p["g"], p["be"])


# ------------------------------------------------------------------------------
# Pure-JAX reference (faithful to the PyTorch forward, incl. the buggy view)
# ------------------------------------------------------------------------------
def mha_ref(x, p):
    b_ = x.shape[0]
    q = x @ p["wq"] + p["bq"]
    k = x @ p["wk"] + p["bk"]
    v = x @ p["wv"] + p["bv"]
    qh = q.reshape(b_ * NUM_HEAD, -1, DIM_HEAD)
    kh = k.reshape(b_ * NUM_HEAD, -1, DIM_HEAD)
    vh = v.reshape(b_ * NUM_HEAD, -1, DIM_HEAD)
    scale = DIM_HEAD ** (-0.5)
    att = jax.nn.softmax(jnp.einsum("gqd,gkd->gqk", qh, kh) * scale, axis=-1)
    ctx = jnp.einsum("gqk,gkd->gqd", att, vh).reshape(b_, -1, NUM_HEAD * DIM_HEAD)
    out = ctx @ p["wo"] + p["bo"] + x
    mu = jnp.mean(out, -1, keepdims=True)
    var = jnp.mean((out - mu) ** 2, -1, keepdims=True)
    return (out - mu) / jnp.sqrt(var + EPS) * p["g"] + p["be"]


# ------------------------------------------------------------------------------
if __name__ == "__main__":
    key = jax.random.PRNGKey(0)
    ks = jax.random.split(key, 6)

    def lin(k, din, dout):
        k1, k2 = jax.random.split(k)
        w = jax.random.normal(k1, (din, dout), jnp.float32) * 0.1   # (in, out): pre-transposed
        b = jax.random.normal(k2, (1, dout), jnp.float32) * 0.1
        return w, b

    wq, bq = lin(ks[0], DIM_MODEL, DIM_MODEL)
    wk, bk = lin(ks[1], DIM_MODEL, DIM_MODEL)
    wv, bv = lin(ks[2], DIM_MODEL, DIM_MODEL)
    wo, bo = lin(ks[3], DIM_MODEL, DIM_MODEL)

    params = dict(
        wq=wq, bq=bq, wk=wk, bk=bk, wv=wv, bv=bv, wo=wo, bo=bo,
        g=jnp.ones((1, DIM_MODEL), jnp.float32),
        be=jnp.zeros((1, DIM_MODEL), jnp.float32),
    )

    x = jax.random.normal(ks[5], (B, S, DIM_MODEL), jnp.float32)

    out = mha_forward(x, params)
    out = jax.block_until_ready(out)

    ref = mha_ref(x, params)
    assert out.shape == (B, S, DIM_MODEL)
    # Slightly relaxed tolerance to accommodate the approximate (EUP) reciprocal
    # used for the softmax denominator.
    assert jnp.allclose(out, ref, atol=2e-3, rtol=2e-3), "Pallas output mismatch vs reference"

    print("KERNEL_OK")
</pallas_src>

<mosaic_0001>
module attributes {stable_mosaic.version = 11 : i64} {
  func.func @mha_kernel(%arg0: i32, %arg1: memref<1x8x6xf32, #tpu.memory_space<vmem>>, %arg2: memref<6x18xf32, #tpu.memory_space<vmem>>, %arg3: memref<1x18xf32, #tpu.memory_space<vmem>>, %arg4: memref<6x6xf32, #tpu.memory_space<vmem>>, %arg5: memref<1x6xf32, #tpu.memory_space<vmem>>, %arg6: memref<1x6xf32, #tpu.memory_space<vmem>>, %arg7: memref<1x6xf32, #tpu.memory_space<vmem>>, %arg8: memref<1x8x6xf32, #tpu.memory_space<vmem>>, %arg9: memref<8x3xf32, #tpu.memory_space<vmem>>, %arg10: memref<8x3xf32, #tpu.memory_space<vmem>>, %arg11: memref<8x3xf32, #tpu.memory_space<vmem>>, %arg12: memref<8x6xf32, #tpu.memory_space<vmem>>) attributes {dimension_semantics = [#tpu.dimension_semantics<parallel>], iteration_bounds = array<i64: 2>, scalar_prefetch = 0 : i64, scratch_operands = 4 : i64, tpu.core_type = #tpu.core_type<tc>, window_params = [{transform_indices = @transform_0, window_bounds = array<i64: 1, 8, 6>}, {pipeline_mode = #tpu.pipeline_mode<synchronous>, transform_indices = @transform_1, window_bounds = array<i64: 6, 18>}, {pipeline_mode = #tpu.pipeline_mode<synchronous>, transform_indices = @transform_2, window_bounds = array<i64: 1, 18>}, {pipeline_mode = #tpu.pipeline_mode<synchronous>, transform_indices = @transform_3, window_bounds = array<i64: 6, 6>}, {pipeline_mode = #tpu.pipeline_mode<synchronous>, transform_indices = @transform_4, window_bounds = array<i64: 1, 6>}, {pipeline_mode = #tpu.pipeline_mode<synchronous>, transform_indices = @transform_5, window_bounds = array<i64: 1, 6>}, {pipeline_mode = #tpu.pipeline_mode<synchronous>, transform_indices = @transform_6, window_bounds = array<i64: 1, 6>}, {transform_indices = @transform_7, window_bounds = array<i64: 1, 8, 6>}]} {
    %c0 = arith.constant 0 : index
    %c0_0 = arith.constant 0 : index
    %c0_1 = arith.constant 0 : index
    %0 = vector.load %arg1[%c0, %c0_0, %c0_1] : memref<1x8x6xf32, #tpu.memory_space<vmem>>, vector<1x8x6xf32>
    %1 = vector.shape_cast %0 : vector<1x8x6xf32> to vector<8x6xf32>
    %c0_2 = arith.constant 0 : index
    %c0_3 = arith.constant 0 : index
    %2 = vector.load %arg2[%c0_2, %c0_3] : memref<6x18xf32, #tpu.memory_space<vmem>>, vector<6x18xf32>
    %cst = arith.constant dense<0.000000e+00> : vector<8x18xf32>
    %3 = tpu.matmul %1, %2, %cst {dimension_numbers = #tpu.dot_dimension_numbers<[1], [0], [0], [1], [0, 0, 1, 1], [], []>} : vector<8x6xf32>, vector<6x18xf32>, vector<8x18xf32> -> vector<8x18xf32>
    %c0_4 = arith.constant 0 : index
    %c0_5 = arith.constant 0 : index
    %4 = vector.load %arg3[%c0_4, %c0_5] : memref<1x18xf32, #tpu.memory_space<vmem>>, vector<1x18xf32>
    %5 = vector.broadcast %4 : vector<1x18xf32> to vector<8x18xf32>
    %6 = arith.addf %3, %5 : vector<8x18xf32>
    %7 = vector.extract_strided_slice %6 {offsets = [0, 0], sizes = [8, 6], strides = [1, 1]} : vector<8x18xf32> to vector<8x6xf32>
    %8 = vector.extract_strided_slice %6 {offsets = [0, 6], sizes = [8, 6], strides = [1, 1]} : vector<8x18xf32> to vector<8x6xf32>
    %9 = vector.extract_strided_slice %6 {offsets = [0, 12], sizes = [8, 6], strides = [1, 1]} : vector<8x18xf32> to vector<8x6xf32>
    %10 = vector.extract_strided_slice %7 {offsets = [0, 0], sizes = [4, 3], strides = [1, 1]} : vector<8x6xf32> to vector<4x3xf32>
    %c0_6 = arith.constant 0 : index
    %c0_7 = arith.constant 0 : index
    %11 = vector.load %arg9[%c0_6, %c0_7] : memref<8x3xf32, #tpu.memory_space<vmem>>, vector<4x3xf32>
    tpu.vector_store %arg9[%c0_6, %c0_7], %10 {strides = array<i32>} : memref<8x3xf32, #tpu.memory_space<vmem>>, vector<4x3xf32>,
    %12 = vector.extract_strided_slice %8 {offsets = [0, 0], sizes = [4, 3], strides = [1, 1]} : vector<8x6xf32> to vector<4x3xf32>
    %c0_8 = arith.constant 0 : index
    %c0_9 = arith.constant 0 : index
    %13 = vector.load %arg10[%c0_8, %c0_9] : memref<8x3xf32, #tpu.memory_space<vmem>>, vector<4x3xf32>
    tpu.vector_store %arg10[%c0_8, %c0_9], %12 {strides = array<i32>} : memref<8x3xf32, #tpu.memory_space<vmem>>, vector<4x3xf32>,
    %14 = vector.extract_strided_slice %9 {offsets = [0, 0], sizes = [4, 3], strides = [1, 1]} : vector<8x6xf32> to vector<4x3xf32>
    %c0_10 = arith.constant 0 : index
    %c0_11 = arith.constant 0 : index
    %15 = vector.load %arg11[%c0_10, %c0_11] : memref<8x3xf32, #tpu.memory_space<vmem>>, vector<4x3xf32>
    tpu.vector_store %arg11[%c0_10, %c0_11], %14 {strides = array<i32>} : memref<8x3xf32, #tpu.memory_space<vmem>>, vector<4x3xf32>,
    %16 = vector.extract_strided_slice %7 {offsets = [0, 3], sizes = [4, 3], strides = [1, 1]} : vector<8x6xf32> to vector<4x3xf32>
    %c4 = arith.constant 4 : index
    %c0_12 = arith.constant 0 : index
    %17 = vector.load %arg9[%c4, %c0_12] : memref<8x3xf32, #tpu.memory_space<vmem>>, vector<4x3xf32>
    tpu.vector_store %arg9[%c4, %c0_12], %16 {strides = array<i32>} : memref<8x3xf32, #tpu.memory_space<vmem>>, vector<4x3xf32>,
    %18 = vector.extract_strided_slice %8 {offsets = [0, 3], sizes = [4, 3], strides = [1, 1]} : vector<8x6xf32> to vector<4x3xf32>
    %c4_13 = arith.constant 4 : index
    %c0_14 = arith.constant 0 : index
    %19 = vector.load %arg10[%c4_13, %c0_14] : memref<8x3xf32, #tpu.memory_space<vmem>>, vector<4x3xf32>
    tpu.vector_store %arg10[%c4_13, %c0_14], %18 {strides = array<i32>} : memref<8x3xf32, #tpu.memory_space<vmem>>, vector<4x3xf32>,
    %20 = vector.extract_strided_slice %9 {offsets = [0, 3], sizes = [4, 3], strides = [1, 1]} : vector<8x6xf32> to vector<4x3xf32>
    %c4_15 = arith.constant 4 : index
    %c0_16 = arith.constant 0 : index
    %21 = vector.load %arg11[%c4_15, %c0_16] : memref<8x3xf32, #tpu.memory_space<vmem>>, vector<4x3xf32>
    tpu.vector_store %arg11[%c4_15, %c0_16], %20 {strides = array<i32>} : memref<8x3xf32, #tpu.memory_space<vmem>>, vector<4x3xf32>,
    %c0_17 = arith.constant 0 : index
    %c0_18 = arith.constant 0 : index
    %22 = vector.load %arg9[%c0_17, %c0_18] : memref<8x3xf32, #tpu.memory_space<vmem>>, vector<8x3xf32>
    %c0_19 = arith.constant 0 : index
    %c0_20 = arith.constant 0 : index
    %23 = vector.load %arg10[%c0_19, %c0_20] : memref<8x3xf32, #tpu.memory_space<vmem>>, vector<8x3xf32>
    %c0_21 = arith.constant 0 : index
    %c0_22 = arith.constant 0 : index
    %24 = vector.load %arg11[%c0_21, %c0_22] : memref<8x3xf32, #tpu.memory_space<vmem>>, vector<8x3xf32>
    %cst_23 = arith.constant dense<0.000000e+00> : vector<8x8xf32>
    %25 = tpu.matmul %22, %23, %cst_23 {dimension_numbers = #tpu.dot_dimension_numbers<[1], [1], [0], [0], [0, 0, 1, 0], [], []>} : vector<8x3xf32>, vector<8x3xf32>, vector<8x8xf32> -> vector<8x8xf32>
    %cst_24 = arith.constant 0.577350259 : f32
    %26 = vector.broadcast %cst_24 : f32 to vector<8x8xf32>
    %27 = arith.mulf %25, %26 : vector<8x8xf32>
    %cst_25 = arith.constant dense<0xFF800000> : vector<8xf32>
    %28 = vector.multi_reduction <maximumf>, %27, %cst_25 [1] : vector<8x8xf32> to vector<8xf32>
    %29 = vector.shape_cast %28 : vector<8xf32> to vector<8x1xf32>
    %30 = vector.broadcast %29 : vector<8x1xf32> to vector<8x8xf32>
    %31 = arith.subf %27, %30 : vector<8x8xf32>
    %32 = math.exp %31 : vector<8x8xf32>
    %cst_26 = arith.constant dense<0.000000e+00> : vector<8xf32>
    %33 = vector.multi_reduction <add>, %32, %cst_26 [1] : vector<8x8xf32> to vector<8xf32>
    %34 = vector.shape_cast %33 : vector<8xf32> to vector<8x1xf32>
    %35 = tpu.reciprocal %34 {approx = true} : vector<8x1xf32> -> vector<8x1xf32>
    %36 = vector.broadcast %35 : vector<8x1xf32> to vector<8x8xf32>
    %37 = arith.mulf %32, %36 : vector<8x8xf32>
    %cst_27 = arith.constant dense<0.000000e+00> : vector<8x3xf32>
    %38 = tpu.matmul %37, %24, %cst_27 {dimension_numbers = #tpu.dot_dimension_numbers<[1], [0], [0], [1], [0, 0, 1, 1], [], []>} : vector<8x8xf32>, vector<8x3xf32>, vector<8x3xf32> -> vector<8x3xf32>
    %39 = vector.extract_strided_slice %38 {offsets = [0, 0], sizes = [4, 3], strides = [1, 1]} : vector<8x3xf32> to vector<4x3xf32>
    %c0_28 = arith.constant 0 : index
    %c0_29 = arith.constant 0 : index
    %40 = vector.load %arg12[%c0_28, %c0_29] : memref<8x6xf32, #tpu.memory_space<vmem>>, vector<4x3xf32>
    tpu.vector_store %arg12[%c0_28, %c0_29], %39 {strides = array<i32>} : memref<8x6xf32, #tpu.memory_space<vmem>>, vector<4x3xf32>,
    %41 = vector.extract_strided_slice %38 {offsets = [4, 0], sizes = [4, 3], strides = [1, 1]} : vector<8x3xf32> to vector<4x3xf32>
    %c0_30 = arith.constant 0 : index
    %c3 = arith.constant 3 : index
    %42 = vector.load %arg12[%c0_30, %c3] : memref<8x6xf32, #tpu.memory_space<vmem>>, vector<4x3xf32>
    tpu.vector_store %arg12[%c0_30, %c3], %41 {strides = array<i32>} : memref<8x6xf32, #tpu.memory_space<vmem>>, vector<4x3xf32>,
    %43 = vector.extract_strided_slice %7 {offsets = [4, 0], sizes = [4, 3], strides = [1, 1]} : vector<8x6xf32> to vector<4x3xf32>
    %c0_31 = arith.constant 0 : index
    %c0_32 = arith.constant 0 : index
    %44 = vector.load %arg9[%c0_31, %c0_32] : memref<8x3xf32, #tpu.memory_space<vmem>>, vector<4x3xf32>
    tpu.vector_store %arg9[%c0_31, %c0_32], %43 {strides = array<i32>} : memref<8x3xf32, #tpu.memory_space<vmem>>, vector<4x3xf32>,
    %45 = vector.extract_strided_slice %8 {offsets = [4, 0], sizes = [4, 3], strides = [1, 1]} : vector<8x6xf32> to vector<4x3xf32>
    %c0_33 = arith.constant 0 : index
    %c0_34 = arith.constant 0 : index
    %46 = vector.load %arg10[%c0_33, %c0_34] : memref<8x3xf32, #tpu.memory_space<vmem>>, vector<4x3xf32>
    tpu.vector_store %arg10[%c0_33, %c0_34], %45 {strides = array<i32>} : memref<8x3xf32, #tpu.memory_space<vmem>>, vector<4x3xf32>,
    %47 = vector.extract_strided_slice %9 {offsets = [4, 0], sizes = [4, 3], strides = [1, 1]} : vector<8x6xf32> to vector<4x3xf32>
    %c0_35 = arith.constant 0 : index
    %c0_36 = arith.constant 0 : index
    %48 = vector.load %arg11[%c0_35, %c0_36] : memref<8x3xf32, #tpu.memory_space<vmem>>, vector<4x3xf32>
    tpu.vector_store %arg11[%c0_35, %c0_36], %47 {strides = array<i32>} : memref<8x3xf32, #tpu.memory_space<vmem>>, vector<4x3xf32>,
    %49 = vector.extract_strided_slice %7 {offsets = [4, 3], sizes = [4, 3], strides = [1, 1]} : vector<8x6xf32> to vector<4x3xf32>
    %c4_37 = arith.constant 4 : index
    %c0_38 = arith.constant 0 : index
    %50 = vector.load %arg9[%c4_37, %c0_38] : memref<8x3xf32, #tpu.memory_space<vmem>>, vector<4x3xf32>
    tpu.vector_store %arg9[%c4_37, %c0_38], %49 {strides = array<i32>} : memref<8x3xf32, #tpu.memory_space<vmem>>, vector<4x3xf32>,
    %51 = vector.extract_strided_slice %8 {offsets = [4, 3], sizes = [4, 3], strides = [1, 1]} : vector<8x6xf32> to vector<4x3xf32>
    %c4_39 = arith.constant 4 : index
    %c0_40 = arith.constant 0 : index
    %52 = vector.load %arg10[%c4_39, %c0_40] : memref<8x3xf32, #tpu.memory_space<vmem>>, vector<4x3xf32>
    tpu.vector_store %arg10[%c4_39, %c0_40], %51 {strides = array<i32>} : memref<8x3xf32, #tpu.memory_space<vmem>>, vector<4x3xf32>,
    %53 = vector.extract_strided_slice %9 {offsets = [4, 3], sizes = [4, 3], strides = [1, 1]} : vector<8x6xf32> to vector<4x3xf32>
    %c4_41 = arith.constant 4 : index
    %c0_42 = arith.constant 0 : index
    %54 = vector.load %arg11[%c4_41, %c0_42] : memref<8x3xf32, #tpu.memory_space<vmem>>, vector<4x3xf32>
    tpu.vector_store %arg11[%c4_41, %c0_42], %53 {strides = array<i32>} : memref<8x3xf32, #tpu.memory_space<vmem>>, vector<4x3xf32>,
    %c0_43 = arith.constant 0 : index
    %c0_44 = arith.constant 0 : index
    %55 = vector.load %arg9[%c0_43, %c0_44] : memref<8x3xf32, #tpu.memory_space<vmem>>, vector<8x3xf32>
    %c0_45 = arith.constant 0 : index
    %c0_46 = arith.constant 0 : index
    %56 = vector.load %arg10[%c0_45, %c0_46] : memref<8x3xf32, #tpu.memory_space<vmem>>, vector<8x3xf32>
    %c0_47 = arith.constant 0 : index
    %c0_48 = arith.constant 0 : index
    %57 = vector.load %arg11[%c0_47, %c0_48] : memref<8x3xf32, #tpu.memory_space<vmem>>, vector<8x3xf32>
    %cst_49 = arith.constant dense<0.000000e+00> : vector<8x8xf32>
    %58 = tpu.matmul %55, %56, %cst_49 {dimension_numbers = #tpu.dot_dimension_numbers<[1], [1], [0], [0], [0, 0, 1, 0], [], []>} : vector<8x3xf32>, vector<8x3xf32>, vector<8x8xf32> -> vector<8x8xf32>
    %cst_50 = arith.constant 0.577350259 : f32
    %59 = vector.broadcast %cst_50 : f32 to vector<8x8xf32>
    %60 = arith.mulf %58, %59 : vector<8x8xf32>
    %cst_51 = arith.constant dense<0xFF800000> : vector<8xf32>
    %61 = vector.multi_reduction <maximumf>, %60, %cst_51 [1] : vector<8x8xf32> to vector<8xf32>
    %62 = vector.shape_cast %61 : vector<8xf32> to vector<8x1xf32>
    %63 = vector.broadcast %62 : vector<8x1xf32> to vector<8x8xf32>
    %64 = arith.subf %60, %63 : vector<8x8xf32>
    %65 = math.exp %64 : vector<8x8xf32>
    %cst_52 = arith.constant dense<0.000000e+00> : vector<8xf32>
    %66 = vector.multi_reduction <add>, %65, %cst_52 [1] : vector<8x8xf32> to vector<8xf32>
    %67 = vector.shape_cast %66 : vector<8xf32> to vector<8x1xf32>
    %68 = tpu.reciprocal %67 {approx = true} : vector<8x1xf32> -> vector<8x1xf32>
    %69 = vector.broadcast %68 : vector<8x1xf32> to vector<8x8xf32>
    %70 = arith.mulf %65, %69 : vector<8x8xf32>
    %cst_53 = arith.constant dense<0.000000e+00> : vector<8x3xf32>
    %71 = tpu.matmul %70, %57, %cst_53 {dimension_numbers = #tpu.dot_dimension_numbers<[1], [0], [0], [1], [0, 0, 1, 1], [], []>} : vector<8x8xf32>, vector<8x3xf32>, vector<8x3xf32> -> vector<8x3xf32>
    %72 = vector.extract_strided_slice %71 {offsets = [0, 0], sizes = [4, 3], strides = [1, 1]} : vector<8x3xf32> to vector<4x3xf32>
    %c4_54 = arith.constant 4 : index
    %c0_55 = arith.constant 0 : index
    %73 = vector.load %arg12[%c4_54, %c0_55] : memref<8x6xf32, #tpu.memory_space<vmem>>, vector<4x3xf32>
    tpu.vector_store %arg12[%c4_54, %c0_55], %72 {strides = array<i32>} : memref<8x6xf32, #tpu.memory_space<vmem>>, vector<4x3xf32>,
    %74 = vector.extract_strided_slice %71 {offsets = [4, 0], sizes = [4, 3], strides = [1, 1]} : vector<8x3xf32> to vector<4x3xf32>
    %c4_56 = arith.constant 4 : index
    %c3_57 = arith.constant 3 : index
    %75 = vector.load %arg12[%c4_56, %c3_57] : memref<8x6xf32, #tpu.memory_space<vmem>>, vector<4x3xf32>
    tpu.vector_store %arg12[%c4_56, %c3_57], %74 {strides = array<i32>} : memref<8x6xf32, #tpu.memory_space<vmem>>, vector<4x3xf32>,
    %c0_58 = arith.constant 0 : index
    %c0_59 = arith.constant 0 : index
    %76 = vector.load %arg12[%c0_58, %c0_59] : memref<8x6xf32, #tpu.memory_space<vmem>>, vector<8x6xf32>
    %c0_60 = arith.constant 0 : index
    %c0_61 = arith.constant 0 : index
    %77 = vector.load %arg4[%c0_60, %c0_61] : memref<6x6xf32, #tpu.memory_space<vmem>>, vector<6x6xf32>
    %cst_62 = arith.constant dense<0.000000e+00> : vector<8x6xf32>
    %78 = tpu.matmul %76, %77, %cst_62 {dimension_numbers = #tpu.dot_dimension_numbers<[1], [0], [0], [1], [0, 0, 1, 1], [], []>} : vector<8x6xf32>, vector<6x6xf32>, vector<8x6xf32> -> vector<8x6xf32>
    %c0_63 = arith.constant 0 : index
    %c0_64 = arith.constant 0 : index
    %79 = vector.load %arg5[%c0_63, %c0_64] : memref<1x6xf32, #tpu.memory_space<vmem>>, vector<1x6xf32>
    %80 = vector.broadcast %79 : vector<1x6xf32> to vector<8x6xf32>
    %81 = arith.addf %78, %80 : vector<8x6xf32>
    %82 = arith.addf %81, %1 : vector<8x6xf32>
    %cst_65 = arith.constant dense<0.000000e+00> : vector<8xf32>
    %83 = vector.multi_reduction <add>, %82, %cst_65 [1] : vector<8x6xf32> to vector<8xf32>
    %84 = vector.shape_cast %83 : vector<8xf32> to vector<8x1xf32>
    %cst_66 = arith.constant 6.000000e+00 : f32
    %85 = vector.broadcast %cst_66 : f32 to vector<8x1xf32>
    %86 = arith.divf %84, %85 : vector<8x1xf32>
    %87 = vector.broadcast %86 : vector<8x1xf32> to vector<8x6xf32>
    %88 = arith.subf %82, %87 : vector<8x6xf32>
    %89 = arith.mulf %88, %88 : vector<8x6xf32>
    %cst_67 = arith.constant dense<0.000000e+00> : vector<8xf32>
    %90 = vector.multi_reduction <add>, %89, %cst_67 [1] : vector<8x6xf32> to vector<8xf32>
    %91 = vector.shape_cast %90 : vector<8xf32> to vector<8x1xf32>
    %cst_68 = arith.constant 6.000000e+00 : f32
    %92 = vector.broadcast %cst_68 : f32 to vector<8x1xf32>
    %93 = arith.divf %91, %92 : vector<8x1xf32>
    %94 = vector.broadcast %86 : vector<8x1xf32> to vector<8x6xf32>
    %95 = arith.subf %82, %94 : vector<8x6xf32>
    %cst_69 = arith.constant 9.99999974E-6 : f32
    %96 = vector.broadcast %cst_69 : f32 to vector<8x1xf32>
    %97 = arith.addf %93, %96 : vector<8x1xf32>
    %98 = math.rsqrt %97 : vector<8x1xf32>
    %99 = vector.broadcast %98 : vector<8x1xf32> to vector<8x6xf32>
    %100 = arith.mulf %95, %99 : vector<8x6xf32>
    %c0_70 = arith.constant 0 : index
    %c0_71 = arith.constant 0 : index
    %101 = vector.load %arg6[%c0_70, %c0_71] : memref<1x6xf32, #tpu.memory_space<vmem>>, vector<1x6xf32>
    %102 = vector.broadcast %101 : vector<1x6xf32> to vector<8x6xf32>
    %103 = arith.mulf %100, %102 : vector<8x6xf32>
    %c0_72 = arith.constant 0 : index
    %c0_73 = arith.constant 0 : index
    %104 = vector.load %arg7[%c0_72, %c0_73] : memref<1x6xf32, #tpu.memory_space<vmem>>, vector<1x6xf32>
    %105 = vector.broadcast %104 : vector<1x6xf32> to vector<8x6xf32>
    %106 = arith.addf %103, %105 : vector<8x6xf32>
    %c0_74 = arith.constant 0 : index
    %c0_75 = arith.constant 0 : index
    %c0_76 = arith.constant 0 : index
    %107 = vector.load %arg8[%c0_74, %c0_75, %c0_76] : memref<1x8x6xf32, #tpu.memory_space<vmem>>, vector<1x8x6xf32>
    %108 = vector.shape_cast %107 : vector<1x8x6xf32> to vector<8x6xf32>
    %109 = vector.shape_cast %106 : vector<8x6xf32> to vector<1x8x6xf32>
    tpu.vector_store %arg8[%c0_74, %c0_75, %c0_76], %109 {strides = array<i32>} : memref<1x8x6xf32, #tpu.memory_space<vmem>>, vector<1x8x6xf32>,
    return
  }
  func.func @transform_0(%arg0: i32) -> (i32, i32, i32) {
    %c0_i32 = arith.constant 0 : i32
    %c0_i32_0 = arith.constant 0 : i32
    %c0_i32_1 = arith.constant 0 : i32
    return %arg0, %c0_i32, %c0_i32_0 : i32, i32, i32
  }
  func.func @transform_1(%arg0: i32) -> (i32, i32) {
    %c0_i32 = arith.constant 0 : i32
    %c0_i32_0 = arith.constant 0 : i32
    %c0_i32_1 = arith.constant 0 : i32
    return %c0_i32, %c0_i32_0 : i32, i32
  }
  func.func @transform_2(%arg0: i32) -> (i32, i32) {
    %c0_i32 = arith.constant 0 : i32
    %c0_i32_0 = arith.constant 0 : i32
    %c0_i32_1 = arith.constant 0 : i32
    return %c0_i32, %c0_i32_0 : i32, i32
  }
  func.func @transform_3(%arg0: i32) -> (i32, i32) {
    %c0_i32 = arith.constant 0 : i32
    %c0_i32_0 = arith.constant 0 : i32
    %c0_i32_1 = arith.constant 0 : i32
    return %c0_i32, %c0_i32_0 : i32, i32
  }
  func.func @transform_4(%arg0: i32) -> (i32, i32) {
    %c0_i32 = arith.constant 0 : i32
    %c0_i32_0 = arith.constant 0 : i32
    %c0_i32_1 = arith.constant 0 : i32
    return %c0_i32, %c0_i32_0 : i32, i32
  }
  func.func @transform_5(%arg0: i32) -> (i32, i32) {
    %c0_i32 = arith.constant 0 : i32
    %c0_i32_0 = arith.constant 0 : i32
    %c0_i32_1 = arith.constant 0 : i32
    return %c0_i32, %c0_i32_0 : i32, i32
  }
  func.func @transform_6(%arg0: i32) -> (i32, i32) {
    %c0_i32 = arith.constant 0 : i32
    %c0_i32_0 = arith.constant 0 : i32
    %c0_i32_1 = arith.constant 0 : i32
    return %c0_i32, %c0_i32_0 : i32, i32
  }
  func.func @transform_7(%arg0: i32) -> (i32, i32, i32) {
    %c0_i32 = arith.constant 0 : i32
    %c0_i32_0 = arith.constant 0 : i32
    %c0_i32_1 = arith.constant 0 : i32
    return %arg0, %c0_i32, %c0_i32_0 : i32, i32, i32
  }
}

</mosaic_0001>

<llo_original>
// kernel: tpu_custom_call.1
$region0: #{tpu_custom_call.1}
  #allocation0 [shape = 'u32[]', space=smem, size = 0x4, offset = 0x4, fixed_abs, tag = 'smem constant byte address 0x4 - core index']
  #allocation1 [shape = 'u32[144,128]{1,0:T(1,128)}', space=vmem, size = 0x12000, scoped, tag = 'internal scratch']
  #allocation2 [shape = 'f32[8,3]{1,0:T(8,128)}', space=vmem, size = 0x1000, scoped, tag = 'scratch operand']
  #allocation3 [shape = 'f32[8,3]{1,0:T(8,128)}', space=vmem, size = 0x1000, scoped, tag = 'scratch operand']
  #allocation4 [shape = 'f32[8,3]{1,0:T(8,128)}', space=vmem, size = 0x1000, scoped, tag = 'scratch operand']
  #allocation5 [shape = 'f32[8,6]{1,0:T(8,128)}', space=vmem, size = 0x1000, scoped, tag = 'scratch operand']
  %s0 = inlined_call_operand.vmem [shape: f32[2,8,6], index: 0, kind: input, shape index: {}]
  %s1 = inlined_call_operand.vmem [shape: f32[6,18], index: 1, kind: input, shape index: {}]
  %s2 = inlined_call_operand.vmem [shape: f32[1,18], index: 2, kind: input, shape index: {}]
  %s3 = inlined_call_operand.vmem [shape: f32[6,6], index: 3, kind: input, shape index: {}]
  %s4 = inlined_call_operand.vmem [shape: f32[1,6], index: 4, kind: input, shape index: {}]
  %s5 = inlined_call_operand.vmem [shape: f32[1,6], index: 5, kind: input, shape index: {}]
  %s6 = inlined_call_operand.vmem [shape: f32[1,6], index: 6, kind: input, shape index: {}]
  %s7 = inlined_call_operand.vmem [shape: f32[2,8,6], index: 7, kind: output, shape index: {}]
  %s8 = sld [smem:[#allocation0]]
  $region61: #{tpu_custom_call.1} parent=0
    _
  %s10 = ssub.s32 1, %s8
  %s11 = scalar_select 0, %s10, %s8
  loop: start=0, step=1, limit=4
  $region2: #{tpu_custom_call.1} parent=0 // loop_pre_header
    _
  $region3: #{tpu_custom_call.1} parent=0 // loop_header
    %s13 = sphi 0, %s17
    %p14 = scmp.ge.s32.totalorder %s13, 4
    %s23 = sphi 0, %s25
    %s26 = sphi 0, %s23
    %s27 = sphi 0, %s26
    %s43 = sphi 0, %s27
    %s47 = sphi 0, %s47
    %s49 = sphi 0, %s47
    %s50 = sphi 0, %s49
    %s64 = sphi 0, %s50
    %s68 = sphi 0, %s68
    %s70 = sphi 0, %s68
    %s71 = sphi 0, %s70
    %s85 = sphi 0, %s71
    %s89 = sphi 0, %s89
    %s91 = sphi 0, %s89
    %s92 = sphi 0, %s91
    %s106 = sphi 0, %s92
    %s110 = sphi 0, %s110
    %s112 = sphi 0, %s110
    %s113 = sphi 0, %s112
    %s127 = sphi 0, %s113
    %s131 = sphi 0, %s131
    %s133 = sphi 0, %s131
    %s134 = sphi 0, %s133
    %s148 = sphi 0, %s134
    %s152 = sphi 0, %s152
    %s154 = sphi 0, %s152
    %s155 = sphi 0, %s154
    %s169 = sphi 0, %s155
    %s175 = sphi 0, %s177
    %s178 = sphi 0, %s175
    %s179 = sphi 0, %s178
    %s195 = sphi 0, %s179
  $region4: #{tpu_custom_call.1} parent=0 // loop_header_branch
    %16 = sbr.rel (%p14) target = $region8
  $region5: #{tpu_custom_call.1} parent=0 // loop_body
    %s18 = ssub.s32 %s13, 1
    %s19 = ssub.s32 %s13, 2
    %s20 = sadd.s32 %s13, 1
    %s21 = ssub.s32 %s13, %s20
    %p22 = scmp.eq.s32.totalorder %s21, 0
    %s24 = sadd.s32 %s23, 1
    %s25 = scalar_select %p22, %s23, %s24
    %p28 = pneg %p22
    %p29 = scmp.eq.s32.totalorder %s13, 1
    %p30 = por %p28, %p29
    %p31 = scmp.ne.s32.totalorder %s23, %s26
    %p32 = scmp.eq.s32.totalorder %s13, 0
    %p33 = por %p31, %p32
    %p34 = scmp.ne.s32.totalorder %s23, %s26
    %p35 = scmp.eq.s32.totalorder %s18, 1
    %p36 = por %p34, %p35
    %p37 = scmp.ne.s32.totalorder %s26, %s27
    %p38 = scmp.eq.s32.totalorder %s18, 0
    %p39 = por %p37, %p38
    %p40 = scmp.ne.s32.totalorder %s26, %s27
    %p41 = scmp.eq.s32.totalorder %s19, 1
    %p42 = por %p40, %p41
    %p44 = scmp.ne.s32.totalorder %s27, %s43
    %p45 = scmp.eq.s32.totalorder %s19, 0
    %p46 = por %p44, %p45
    %s48 = sadd.s32 %s47, 1
    %p51 = scmp.eq.s32.totalorder %s13, 1
    %p52 = scmp.ne.s32.totalorder %s47, %s49
    %p53 = scmp.eq.s32.totalorder %s13, 0
    %p54 = por %p52, %p53
    %p55 = scmp.ne.s32.totalorder %s47, %s49
    %p56 = scmp.eq.s32.totalorder %s18, 1
    %p57 = por %p55, %p56
    %p58 = scmp.ne.s32.totalorder %s49, %s50
    %p59 = scmp.eq.s32.totalorder %s18, 0
    %p60 = por %p58, %p59
    %p61 = scmp.ne.s32.totalorder %s49, %s50
    %p62 = scmp.eq.s32.totalorder %s19, 1
    %p63 = por %p61, %p62
    %p65 = scmp.ne.s32.totalorder %s50, %s64
    %p66 = scmp.eq.s32.totalorder %s19, 0
    %p67 = por %p65, %p66
    %s69 = sadd.s32 %s68, 1
    %p72 = scmp.eq.s32.totalorder %s13, 1
    %p73 = scmp.ne.s32.totalorder %s68, %s70
    %p74 = scmp.eq.s32.totalorder %s13, 0
    %p75 = por %p73, %p74
    %p76 = scmp.ne.s32.totalorder %s68, %s70
    %p77 = scmp.eq.s32.totalorder %s18, 1
    %p78 = por %p76, %p77
    %p79 = scmp.ne.s32.totalorder %s70, %s71
    %p80 = scmp.eq.s32.totalorder %s18, 0
    %p81 = por %p79, %p80
    %p82 = scmp.ne.s32.totalorder %s70, %s71
    %p83 = scmp.eq.s32.totalorder %s19, 1
    %p84 = por %p82, %p83
    %p86 = scmp.ne.s32.totalorder %s71, %s85
    %p87 = scmp.eq.s32.totalorder %s19, 0
    %p88 = por %p86, %p87
    %s90 = sadd.s32 %s89, 1
    %p93 = scmp.eq.s32.totalorder %s13, 1
    %p94 = scmp.ne.s32.totalorder %s89, %s91
    %p95 = scmp.eq.s32.totalorder %s13, 0
    %p96 = por %p94, %p95
    %p97 = scmp.ne.s32.totalorder %s89, %s91
    %p98 = scmp.eq.s32.totalorder %s18, 1
    %p99 = por %p97, %p98
    %p100 = scmp.ne.s32.totalorder %s91, %s92
    %p101 = scmp.eq.s32.totalorder %s18, 0
    %p102 = por %p100, %p101
    %p103 = scmp.ne.s32.totalorder %s91, %s92
    %p104 = scmp.eq.s32.totalorder %s19, 1
    %p105 = por %p103, %p104
    %p107 = scmp.ne.s32.totalorder %s92, %s106
    %p108 = scmp.eq.s32.totalorder %s19, 0
    %p109 = por %p107, %p108
    %s111 = sadd.s32 %s110, 1
    %p114 = scmp.eq.s32.totalorder %s13, 1
    %p115 = scmp.ne.s32.totalorder %s110, %s112
    %p116 = scmp.eq.s32.totalorder %s13, 0
    %p117 = por %p115, %p116
    %p118 = scmp.ne.s32.totalorder %s110, %s112
    %p119 = scmp.eq.s32.totalorder %s18, 1
    %p120 = por %p118, %p119
    %p121 = scmp.ne.s32.totalorder %s112, %s113
    %p122 = scmp.eq.s32.totalorder %s18, 0
    %p123 = por %p121, %p122
    %p124 = scmp.ne.s32.totalorder %s112, %s113
    %p125 = scmp.eq.s32.totalorder %s19, 1
    %p126 = por %p124, %p125
    %p128 = scmp.ne.s32.totalorder %s113, %s127
    %p129 = scmp.eq.s32.totalorder %s19, 0
    %p130 = por %p128, %p129
    %s132 = sadd.s32 %s131, 1
    %p135 = scmp.eq.s32.totalorder %s13, 1
    %p136 = scmp.ne.s32.totalorder %s131, %s133
    %p137 = scmp.eq.s32.totalorder %s13, 0
    %p138 = por %p136, %p137
    %p139 = scmp.ne.s32.totalorder %s131, %s133
    %p140 = scmp.eq.s32.totalorder %s18, 1
    %p141 = por %p139, %p140
    %p142 = scmp.ne.s32.totalorder %s133, %s134
    %p143 = scmp.eq.s32.totalorder %s18, 0
    %p144 = por %p142, %p143
    %p145 = scmp.ne.s32.totalorder %s133, %s134
    %p146 = scmp.eq.s32.totalorder %s19, 1
    %p147 = por %p145, %p146
    %p149 = scmp.ne.s32.totalorder %s134, %s148
    %p150 = scmp.eq.s32.totalorder %s19, 0
    %p151 = por %p149, %p150
    %s153 = sadd.s32 %s152, 1
    %p156 = scmp.eq.s32.totalorder %s13, 1
    %p157 = scmp.ne.s32.totalorder %s152, %s154
    %p158 = scmp.eq.s32.totalorder %s13, 0
    %p159 = por %p157, %p158
    %p160 = scmp.ne.s32.totalorder %s152, %s154
    %p161 = scmp.eq.s32.totalorder %s18, 1
    %p162 = por %p160, %p161
    %p163 = scmp.ne.s32.totalorder %s154, %s155
    %p164 = scmp.eq.s32.totalorder %s18, 0
    %p165 = por %p163, %p164
    %p166 = scmp.ne.s32.totalorder %s154, %s155
    %p167 = scmp.eq.s32.totalorder %s19, 1
    %p168 = por %p166, %p167
    %p170 = scmp.ne.s32.totalorder %s155, %s169
    %p171 = scmp.eq.s32.totalorder %s19, 0
    %p172 = por %p170, %p171
    %s173 = ssub.s32 %s13, %s20
    %p174 = scmp.eq.s32.totalorder %s173, 0
    %s176 = sadd.s32 %s175, 1
    %s177 = scalar_select %p174, %s175, %s176
    %p180 = pneg %p174
    %p181 = scmp.eq.s32.totalorder %s13, 1
    %p182 = por %p180, %p181
    %p183 = scmp.ne.s32.totalorder %s175, %s178
    %p184 = scmp.eq.s32.totalorder %s13, 0
    %p185 = por %p183, %p184
    %p186 = scmp.ne.s32.totalorder %s175, %s178
    %p187 = scmp.eq.s32.totalorder %s18, 1
    %p188 = por %p186, %p187
    %p189 = scmp.ne.s32.totalorder %s178, %s179
    %p190 = scmp.eq.s32.totalorder %s18, 0
    %p191 = por %p189, %p190
    %p192 = scmp.ne.s32.totalorder %s178, %s179
    %p193 = scmp.eq.s32.totalorder %s19, 1
    %p194 = por %p192, %p193
    %p196 = scmp.ne.s32.totalorder %s179, %s195
    %p197 = scmp.eq.s32.totalorder %s19, 0
    %p198 = por %p196, %p197
    %p199 = scmp.le.s32.totalorder 1, %s13
    %p200 = scmp.lt.s32.totalorder %s13, 3
    %p201 = pnand %p199, %p200
    %p202 = pneg %p201
    // Predicated region
    $region9: #{tpu_custom_call.1} parent=5 // pred_check
      _
    $region10: #{tpu_custom_call.1} parent=5 // pred_check_branch
      %204 = sbr.rel (%p201) target = $region12
    $region11: #{tpu_custom_call.1} parent=5 // pred_region
      %s205 = ssub.s32 %s13, 1
      // Predicated region
      $region13: #{tpu_custom_call.1} parent=11 // pred_check
        %p206 = pneg %p60
      $region14: #{tpu_custom_call.1} parent=11 // pred_check_branch
        %208 = sbr.rel (%p206) target = $region16
      $region15: #{tpu_custom_call.1} parent=11 // pred_region
        _
      $region16: #{tpu_custom_call.1} parent=11 // pred_fallthru
        _
      // Predicated region
      $region17: #{tpu_custom_call.1} parent=11 // pred_check
        %p209 = pneg %p81
      $region18: #{tpu_custom_call.1} parent=11 // pred_check_branch
        %211 = sbr.rel (%p209) target = $region20
      $region19: #{tpu_custom_call.1} parent=11 // pred_region
        _
      $region20: #{tpu_custom_call.1} parent=11 // pred_fallthru
        _
      // Predicated region
      $region21: #{tpu_custom_call.1} parent=11 // pred_check
        %p212 = pneg %p102
      $region22: #{tpu_custom_call.1} parent=11 // pred_check_branch
        %214 = sbr.rel (%p212) target = $region24
      $region23: #{tpu_custom_call.1} parent=11 // pred_region
        _
      $region24: #{tpu_custom_call.1} parent=11 // pred_fallthru
        _
      // Predicated region
      $region25: #{tpu_custom_call.1} parent=11 // pred_check
        %p215 = pneg %p123
      $region26: #{tpu_custom_call.1} parent=11 // pred_check_branch
        %217 = sbr.rel (%p215) target = $region28
      $region27: #{tpu_custom_call.1} parent=11 // pred_region
        _
      $region28: #{tpu_custom_call.1} parent=11 // pred_fallthru
        _
      // Predicated region
      $region29: #{tpu_custom_call.1} parent=11 // pred_check
        %p218 = pneg %p144
      $region30: #{tpu_custom_call.1} parent=11 // pred_check_branch
        %220 = sbr.rel (%p218) target = $region32
      $region31: #{tpu_custom_call.1} parent=11 // pred_region
        _
      $region32: #{tpu_custom_call.1} parent=11 // pred_fallthru
        _
      // Predicated region
      $region33: #{tpu_custom_call.1} parent=11 // pred_check
        %p221 = pneg %p165
      $region34: #{tpu_custom_call.1} parent=11 // pred_check_branch
        %223 = sbr.rel (%p221) target = $region36
      $region35: #{tpu_custom_call.1} parent=11 // pred_region
        _
      $region36: #{tpu_custom_call.1} parent=11 // pred_fallthru
        _
    $region12: #{tpu_custom_call.1} parent=5 // pred_fallthru
      _
    %p224 = scmp.lt.s32.totalorder %s13, 2
    // Predicated region
    $region37: #{tpu_custom_call.1} parent=5 // pred_check
      %p225 = pneg %p224
    $region38: #{tpu_custom_call.1} parent=5 // pred_check_branch
      %227 = sbr.rel (%p225) target = $region40
    $region39: #{tpu_custom_call.1} parent=5 // pred_region
      // Predicated region
      $region41: #{tpu_custom_call.1} parent=39 // pred_check
        %p228 = pneg %p33
      $region42: #{tpu_custom_call.1} parent=39 // pred_check_branch
        %230 = sbr.rel (%p228) target = $region44
      $region43: #{tpu_custom_call.1} parent=39 // pred_region
        %p231 = scmp.lt.s32.totalorder %s13, 1
        %s232 = scalar_select %p231, %s13, 1
        %s233 = smul.addr %s232, 8
        %s234 = scalar_lea.vmem %s0, %s233
      $region44: #{tpu_custom_call.1} parent=39 // pred_fallthru
        _
    $region40: #{tpu_custom_call.1} parent=5 // pred_fallthru
      _
    %p235 = scmp.le.s32.totalorder 1, %s13
    %p236 = scmp.lt.s32.totalorder %s13, 3
    %p237 = pnand %p235, %p236
    %p238 = pneg %p237
    // Predicated region
    $region45: #{tpu_custom_call.1} parent=5 // pred_check
      _
    $region46: #{tpu_custom_call.1} parent=5 // pred_check_branch
      %240 = sbr.rel (%p237) target = $region48
    $region47: #{tpu_custom_call.1} parent=5 // pred_region
      %s241 = ssub.s32 %s13, 1
      %p242 = scmp.lt.s32.totalorder %s18, 1
      %s243 = scalar_select %p242, %s18, 1
      %s244 = smul.addr %s243, 8
      %s245 = scalar_lea.vmem %s0, %s244
      %p246 = pneg %p39
      %p247 = pneg %p36
      %p248 = pneg %p60
      %p249 = pneg %p57
      %p250 = pneg %p81
      %p251 = pneg %p78
      %p252 = pneg %p102
      %p253 = pneg %p99
      %p254 = pneg %p123
      %p255 = pneg %p120
      %p256 = pneg %p144
      %p257 = pneg %p141
      %p258 = pneg %p165
      %p259 = pneg %p162
      %p260 = pneg %p191
      %p261 = pneg %p188
      %p262 = scmp.lt.s32.totalorder %s18, 1
      %s263 = scalar_select %p262, %s18, 1
      %s264 = smul.addr %s263, 8
      %s265 = scalar_lea.vmem %s7, %s264
      %p266 = scmp.lt.s32.totalorder %s18, 1
      %s267 = scalar_select %p266, %s18, 1
      %s268 = smul.addr %s267, 8
      %s269 = scalar_lea.vmem %s0, %s268
      %p270 = scmp.lt.s32.totalorder %s18, 1
      %s271 = scalar_select %p270, %s18, 1
      %s272 = smul.addr %s271, 8
      %s273 = scalar_lea.vmem %s7, %s272
      %v274 = vld [vmem:[%s269] sm:$0xff]
      %v275 = vld [vmem:[%s1] sm:$0x3f]
      %v276 = vld [vmem:[%s2] sm:$0x1]
      %v278 = vlaneseq
      %v279 = vshrl.u32 %v278, 7
      %v280 = vsub.s32 0, %v279
      %v281 = vrot.slane %v276, %v280
      %vm283 = vcmask 48128
      %v285 = vsel %vm283, %v274, 0
      %vm287 = vcmask 1045504
      %v289 = vsel %vm287, %v275, 0
      %291 = vmatprep.subr.mxu0 0.0
      %292 = vmatpush1.msra.mxu0 %v289
      %293 = vmatprep.subr.mxu0 0.0
      %294 = vmatpush1.msra.mxu0 0.0
      %295 = vmatprep.subr.mxu0 0.0
      %296 = vmatpush1.msra.mxu0 0.0
      %297 = vmatprep.subr.mxu0 0.0
      %298 = vmatpush1.msra.mxu0 0.0
      %299 = vmatprep.subr.mxu0 0.0
      %300 = vmatpush1.msra.mxu0 0.0
      %301 = vmatprep.subr.mxu0 0.0
      %302 = vmatpush1.msra.mxu0 0.0
      %303 = vmatprep.subr.mxu0 0.0
      %304 = vmatpush1.msra.mxu0 0.0
      %305 = vmatprep.subr.mxu0 0.0
      %306 = vmatpush1.msra.mxu0 0.0
      %307 = vmatprep.subr.mxu0 0.0
      %308 = vmatpush1.msra.mxu0 0.0
      %309 = vmatprep.subr.mxu0 0.0
      %310 = vmatpush1.msra.mxu0 0.0
      %311 = vmatprep.subr.mxu0 0.0
      %312 = vmatpush1.msra.mxu0 0.0
      %313 = vmatprep.subr.mxu0 0.0
      %314 = vmatpush1.msra.mxu0 0.0
      %315 = vmatprep.subr.mxu0 0.0
      %316 = vmatpush1.msra.mxu0 0.0
      %317 = vmatprep.subr.mxu0 0.0
      %318 = vmatpush1.msra.mxu0 0.0
      %319 = vmatprep.subr.mxu0 0.0
      %320 = vmatpush1.msra.mxu0 0.0
      %321 = vmatprep.subr.mxu0 0.0
      %322 = vmatpush1.msra.mxu0 0.0
      %323 = vmatprep.subr.mxu0 0.0
      %324 = vmatpush1.msra.mxu0 0.0
      %325 = vmatprep.subr.mxu0 0.0
      %326 = vmatpush1.msra.mxu0 0.0
      %327 = vmatprep.subr.mxu0 0.0
      %328 = vmatpush1.msra.mxu0 0.0
      %329 = vmatprep.subr.mxu0 0.0
      %330 = vmatpush1.msra.mxu0 0.0
      %331 = vmatprep.subr.mxu0 0.0
      %332 = vmatpush1.msra.mxu0 0.0
      %333 = vmatprep.subr.mxu0 0.0
      %334 = vmatpush1.msra.mxu0 0.0
      %335 = vmatprep.subr.mxu0 0.0
      %336 = vmatpush1.msra.mxu0 0.0
      %337 = vmatprep.subr.mxu0 0.0
      %338 = vmatpush1.msra.mxu0 0.0
      %339 = vmatprep.subr.mxu0 0.0
      %340 = vmatpush1.msra.mxu0 0.0
      %341 = vmatprep.subr.mxu0 0.0
      %342 = vmatpush1.msra.mxu0 0.0
      %343 = vmatprep.subr.mxu0 0.0
      %344 = vmatpush1.msra.mxu0 0.0
      %345 = vmatprep.subr.mxu0 0.0
      %346 = vmatpush1.msra.mxu0 0.0
      %347 = vmatprep.subr.mxu0 0.0
      %348 = vmatpush1.msra.mxu0 0.0
      %349 = vmatprep.subr.mxu0 0.0
      %350 = vmatpush1.msra.mxu0 0.0
      %351 = vmatprep.subr.mxu0 0.0
      %352 = vmatpush1.msra.mxu0 0.0
      %353 = vmatprep.subr.mxu0 0.0
      %354 = vmatpush1.msra.mxu0 0.0
      %355 = vmatprep.mubr.f32.mxu0 0.0
      %356 = vmatmul.mubr.f32.gmra.mrb[0].mxu0 %v285
      %v357 = vpop.f32.mrb[0].mxu0
      %v358 = vadd.f32 %v281, %v357
      %v359 = vpop.f32.mrb[0].mxu0
      %360 = vdwg.mxu0
      %vm361 = vcmask 19456
      %362 = vst.msk [vmem:[#allocation2] sm:$0xf] %vm361, %v358
      %364 = vrot.lane.b32.xlu0 %v358, 122
      %v365 = vpop.permute.xlu0 %364
      %367 = vst.msk [vmem:[#allocation3] sm:$0xf] %vm361, %v365
      %368 = vrot.lane.b32.xlu0 %v358, 116
      %v369 = vpop.permute.xlu0 %368
      %371 = vst.msk [vmem:[#allocation4] sm:$0xf] %vm361, %v369
      %372 = vrot.lane.b32.xlu0 %v358, 125
      %v373 = vpop.permute.xlu0 %372
      %375 = vst.msk [vmem:[#allocation2 + $0x4] sm:$0xf] %vm361, %v373
      %376 = vrot.lane.b32.xlu0 %v358, 119
      %v377 = vpop.permute.xlu0 %376
      %379 = vst.msk [vmem:[#allocation3 + $0x4] sm:$0xf] %vm361, %v377
      %380 = vrot.lane.b32.xlu0 %v358, 113
      %v381 = vpop.permute.xlu0 %380
      %383 = vst.msk [vmem:[#allocation4 + $0x4] sm:$0xf] %vm361, %v381
      %v384 = vld [vmem:[#allocation2] sm:$0xff]
      %v385 = vld [vmem:[#allocation3] sm:$0xff]
      %v386 = vld [vmem:[#allocation4] sm:$0xff]
      %vm387 = vcmask 23552
      %v389 = vsel %vm387, %v384, 0
      %v392 = vsel %vm387, %v385, 0
      %394 = vmatprep.subr.mxu0 0.0
      %395 = vmatpush1.xpose.msra.mxu0 %v392
      %396 = vmatprep.subr.mxu0 0.0
      %397 = vmatpush1.xpose.msra.mxu0 0.0
      %398 = vmatprep.subr.mxu0 0.0
      %399 = vmatpush1.xpose.msra.mxu0 0.0
      %400 = vmatprep.subr.mxu0 0.0
      %401 = vmatpush1.xpose.msra.mxu0 0.0
      %402 = vmatprep.subr.mxu0 0.0
      %403 = vmatpush1.xpose.msra.mxu0 0.0
      %404 = vmatprep.subr.mxu0 0.0
      %405 = vmatpush1.xpose.msra.mxu0 0.0
      %406 = vmatprep.subr.mxu0 0.0
      %407 = vmatpush1.xpose.msra.mxu0 0.0
      %408 = vmatprep.subr.mxu0 0.0
      %409 = vmatpush1.xpose.msra.mxu0 0.0
      %410 = vmatprep.subr.mxu0 0.0
      %411 = vmatpush1.xpose.msra.mxu0 0.0
      %412 = vmatprep.subr.mxu0 0.0
      %413 = vmatpush1.xpose.msra.mxu0 0.0
      %414 = vmatprep.subr.mxu0 0.0
      %415 = vmatpush1.xpose.msra.mxu0 0.0
      %416 = vmatprep.subr.mxu0 0.0
      %417 = vmatpush1.xpose.msra.mxu0 0.0
      %418 = vmatprep.subr.mxu0 0.0
      %419 = vmatpush1.xpose.msra.mxu0 0.0
      %420 = vmatprep.subr.mxu0 0.0
      %421 = vmatpush1.xpose.msra.mxu0 0.0
      %422 = vmatprep.subr.mxu0 0.0
      %423 = vmatpush1.xpose.msra.mxu0 0.0
      %424 = vmatprep.subr.mxu0 0.0
      %425 = vmatpush1.xpose.msra.mxu0 0.0
      %426 = vmatprep.subr.mxu0 0.0
      %427 = vmatpush1.xpose.msra.mxu0 0.0
      %428 = vmatprep.subr.mxu0 0.0
      %429 = vmatpush1.xpose.msra.mxu0 0.0
      %430 = vmatprep.subr.mxu0 0.0
      %431 = vmatpush1.xpose.msra.mxu0 0.0
      %432 = vmatprep.subr.mxu0 0.0
      %433 = vmatpush1.xpose.msra.mxu0 0.0
      %434 = vmatprep.subr.mxu0 0.0
      %435 = vmatpush1.xpose.msra.mxu0 0.0
      %436 = vmatprep.subr.mxu0 0.0
      %437 = vmatpush1.xpose.msra.mxu0 0.0
      %438 = vmatprep.subr.mxu0 0.0
      %439 = vmatpush1.xpose.msra.mxu0 0.0
      %440 = vmatprep.subr.mxu0 0.0
      %441 = vmatpush1.xpose.msra.mxu0 0.0
      %442 = vmatprep.subr.mxu0 0.0
      %443 = vmatpush1.xpose.msra.mxu0 0.0
      %444 = vmatprep.subr.mxu0 0.0
      %445 = vmatpush1.xpose.msra.mxu0 0.0
      %446 = vmatprep.subr.mxu0 0.0
      %447 = vmatpush1.xpose.msra.mxu0 0.0
      %448 = vmatprep.subr.mxu0 0.0
      %449 = vmatpush1.xpose.msra.mxu0 0.0
      %450 = vmatprep.subr.mxu0 0.0
      %451 = vmatpush1.xpose.msra.mxu0 0.0
      %452 = vmatprep.subr.mxu0 0.0
      %453 = vmatpush1.xpose.msra.mxu0 0.0
      %454 = vmatprep.subr.mxu0 0.0
      %455 = vmatpush1.xpose.msra.mxu0 0.0
      %456 = vmatprep.subr.mxu0 0.0
      %457 = vmatpush1.xpose.msra.mxu0 0.0
      %458 = vmatprep.mubr.f32.mxu0 0.0
      %459 = vmatmul.mubr.f32.gmra.mrb[0].mxu0 %v389
      %v460 = vpop.f32.mrb[0].mxu0
      %v461 = vadd.f32 0.0, %v460
      %v462 = vpop.f32.mrb[0].mxu0
      %463 = vdwg.mxu0
      %v464 = vmul.f32 %v461, 0.57735026
      %vm465 = vcmask 64512
      %v466 = vsel %vm465, %v464, -inf
      %467 = vmax.xlane.f32.xlu0 %v466
      %v468 = vpop.xlane.xlu0 %467
      %v469 = vsub.f32 %v464, %v468
      %v470 = vmul.f32 %v469, 1.442695
      %v471 = vpow.pop %v470
      %v472 = vsel %vm465, %v471, 0.0
      %473 = vadd.xlane.f32.xlu0 %v472
      %v474 = vpop.xlane.xlu0 %473
      %v475 = vrcp.pop %v474
      %v476 = vmul.f32 %v471, %v475
      %v478 = vsel %vm465, %v476, 0
      %480 = vmatprep.subr.mxu0 0.0
      %481 = vmatpush1.msra.mxu0 %v386
      %482 = vmatprep.subr.mxu0 0.0
      %483 = vmatpush1.msra.mxu0 0.0
      %484 = vmatprep.subr.mxu0 0.0
      %485 = vmatpush1.msra.mxu0 0.0
      %486 = vmatprep.subr.mxu0 0.0
      %487 = vmatpush1.msra.mxu0 0.0
      %488 = vmatprep.subr.mxu0 0.0
      %489 = vmatpush1.msra.mxu0 0.0
      %490 = vmatprep.subr.mxu0 0.0
      %491 = vmatpush1.msra.mxu0 0.0
      %492 = vmatprep.subr.mxu0 0.0
      %493 = vmatpush1.msra.mxu0 0.0
      %494 = vmatprep.subr.mxu0 0.0
      %495 = vmatpush1.msra.mxu0 0.0
      %496 = vmatprep.subr.mxu0 0.0
      %497 = vmatpush1.msra.mxu0 0.0
      %498 = vmatprep.subr.mxu0 0.0
      %499 = vmatpush1.msra.mxu0 0.0
      %500 = vmatprep.subr.mxu0 0.0
      %501 = vmatpush1.msra.mxu0 0.0
      %502 = vmatprep.subr.mxu0 0.0
      %503 = vmatpush1.msra.mxu0 0.0
      %504 = vmatprep.subr.mxu0 0.0
      %505 = vmatpush1.msra.mxu0 0.0
      %506 = vmatprep.subr.mxu0 0.0
      %507 = vmatpush1.msra.mxu0 0.0
      %508 = vmatprep.subr.mxu0 0.0
      %509 = vmatpush1.msra.mxu0 0.0
      %510 = vmatprep.subr.mxu0 0.0
      %511 = vmatpush1.msra.mxu0 0.0
      %512 = vmatprep.subr.mxu0 0.0
      %513 = vmatpush1.msra.mxu0 0.0
      %514 = vmatprep.subr.mxu0 0.0
      %515 = vmatpush1.msra.mxu0 0.0
      %516 = vmatprep.subr.mxu0 0.0
      %517 = vmatpush1.msra.mxu0 0.0
      %518 = vmatprep.subr.mxu0 0.0
      %519 = vmatpush1.msra.mxu0 0.0
      %520 = vmatprep.subr.mxu0 0.0
      %521 = vmatpush1.msra.mxu0 0.0
      %522 = vmatprep.subr.mxu0 0.0
      %523 = vmatpush1.msra.mxu0 0.0
      %524 = vmatprep.subr.mxu0 0.0
      %525 = vmatpush1.msra.mxu0 0.0
      %526 = vmatprep.subr.mxu0 0.0
      %527 = vmatpush1.msra.mxu0 0.0
      %528 = vmatprep.subr.mxu0 0.0
      %529 = vmatpush1.msra.mxu0 0.0
      %530 = vmatprep.subr.mxu0 0.0
      %531 = vmatpush1.msra.mxu0 0.0
      %532 = vmatprep.subr.mxu0 0.0
      %533 = vmatpush1.msra.mxu0 0.0
      %534 = vmatprep.subr.mxu0 0.0
      %535 = vmatpush1.msra.mxu0 0.0
      %536 = vmatprep.subr.mxu0 0.0
      %537 = vmatpush1.msra.mxu0 0.0
      %538 = vmatprep.subr.mxu0 0.0
      %539 = vmatpush1.msra.mxu0 0.0
      %540 = vmatprep.subr.mxu0 0.0
      %541 = vmatpush1.msra.mxu0 0.0
      %542 = vmatprep.subr.mxu0 0.0
      %543 = vmatpush1.msra.mxu0 0.0
      %544 = vmatprep.mubr.f32.mxu0 0.0
      %545 = vmatmul.mubr.f32.gmra.mrb[0].mxu0 %v478
      %v546 = vpop.f32.mrb[0].mxu0
      %v547 = vadd.f32 0.0, %v546
      %v548 = vpop.f32.mrb[0].mxu0
      %549 = vdwg.mxu0
      %550 = vst.msk [vmem:[#allocation5] sm:$0xf] %vm361, %v547
      %552 = vrot.lane.b32.xlu0 %v547, 3
      %v553 = vpop.permute.xlu0 %552
      %vm555 = vcmask 48156
      %556 = vst.msk [vmem:[#allocation5 - $0x4] sm:$0xf0] %vm555, %v553
      %vm557 = vcmask 23556
      %558 = vst.msk [vmem:[#allocation2 - $0x4] sm:$0xf0] %vm557, %v358
      %559 = vst.msk [vmem:[#allocation3 - $0x4] sm:$0xf0] %vm557, %v365
      %560 = vst.msk [vmem:[#allocation4 - $0x4] sm:$0xf0] %vm557, %v369
      %561 = vst.msk [vmem:[#allocation2] sm:$0xf0] %vm557, %v373
      %562 = vst.msk [vmem:[#allocation3] sm:$0xf0] %vm557, %v377
      %563 = vst.msk [vmem:[#allocation4] sm:$0xf0] %vm557, %v381
      %v564 = vld [vmem:[#allocation2] sm:$0xff]
      %v565 = vld [vmem:[#allocation3] sm:$0xff]
      %v566 = vld [vmem:[#allocation4] sm:$0xff]
      %v568 = vsel %vm387, %v564, 0
      %v571 = vsel %vm387, %v565, 0
      %573 = vmatprep.subr.mxu0 0.0
      %574 = vmatpush1.xpose.msra.mxu0 %v571
      %575 = vmatprep.subr.mxu0 0.0
      %576 = vmatpush1.xpose.msra.mxu0 0.0
      %577 = vmatprep.subr.mxu0 0.0
      %578 = vmatpush1.xpose.msra.mxu0 0.0
      %579 = vmatprep.subr.mxu0 0.0
      %580 = vmatpush1.xpose.msra.mxu0 0.0
      %581 = vmatprep.subr.mxu0 0.0
      %582 = vmatpush1.xpose.msra.mxu0 0.0
      %583 = vmatprep.subr.mxu0 0.0
      %584 = vmatpush1.xpose.msra.mxu0 0.0
      %585 = vmatprep.subr.mxu0 0.0
      %586 = vmatpush1.xpose.msra.mxu0 0.0
      %587 = vmatprep.subr.mxu0 0.0
      %588 = vmatpush1.xpose.msra.mxu0 0.0
      %589 = vmatprep.subr.mxu0 0.0
      %590 = vmatpush1.xpose.msra.mxu0 0.0
      %591 = vmatprep.subr.mxu0 0.0
      %592 = vmatpush1.xpose.msra.mxu0 0.0
      %593 = vmatprep.subr.mxu0 0.0
      %594 = vmatpush1.xpose.msra.mxu0 0.0
      %595 = vmatprep.subr.mxu0 0.0
      %596 = vmatpush1.xpose.msra.mxu0 0.0
      %597 = vmatprep.subr.mxu0 0.0
      %598 = vmatpush1.xpose.msra.mxu0 0.0
      %599 = vmatprep.subr.mxu0 0.0
      %600 = vmatpush1.xpose.msra.mxu0 0.0
      %601 = vmatprep.subr.mxu0 0.0
      %602 = vmatpush1.xpose.msra.mxu0 0.0
      %603 = vmatprep.subr.mxu0 0.0
      %604 = vmatpush1.xpose.msra.mxu0 0.0
      %605 = vmatprep.subr.mxu0 0.0
      %606 = vmatpush1.xpose.msra.mxu0 0.0
      %607 = vmatprep.subr.mxu0 0.0
      %608 = vmatpush1.xpose.msra.mxu0 0.0
      %609 = vmatprep.subr.mxu0 0.0
      %610 = vmatpush1.xpose.msra.mxu0 0.0
      %611 = vmatprep.subr.mxu0 0.0
      %612 = vmatpush1.xpose.msra.mxu0 0.0
      %613 = vmatprep.subr.mxu0 0.0
      %614 = vmatpush1.xpose.msra.mxu0 0.0
      %615 = vmatprep.subr.mxu0 0.0
      %616 = vmatpush1.xpose.msra.mxu0 0.0
      %617 = vmatprep.subr.mxu0 0.0
      %618 = vmatpush1.xpose.msra.mxu0 0.0
      %619 = vmatprep.subr.mxu0 0.0
      %620 = vmatpush1.xpose.msra.mxu0 0.0
      %621 = vmatprep.subr.mxu0 0.0
      %622 = vmatpush1.xpose.msra.mxu0 0.0
      %623 = vmatprep.subr.mxu0 0.0
      %624 = vmatpush1.xpose.msra.mxu0 0.0
      %625 = vmatprep.subr.mxu0 0.0
      %626 = vmatpush1.xpose.msra.mxu0 0.0
      %627 = vmatprep.subr.mxu0 0.0
      %628 = vmatpush1.xpose.msra.mxu0 0.0
      %629 = vmatprep.subr.mxu0 0.0
      %630 = vmatpush1.xpose.msra.mxu0 0.0
      %631 = vmatprep.subr.mxu0 0.0
      %632 = vmatpush1.xpose.msra.mxu0 0.0
      %633 = vmatprep.subr.mxu0 0.0
      %634 = vmatpush1.xpose.msra.mxu0 0.0
      %635 = vmatprep.subr.mxu0 0.0
      %636 = vmatpush1.xpose.msra.mxu0 0.0
      %637 = vmatprep.mubr.f32.mxu0 0.0
      %638 = vmatmul.mubr.f32.gmra.mrb[0].mxu0 %v568
      %v639 = vpop.f32.mrb[0].mxu0
      %v640 = vadd.f32 0.0, %v639
      %v641 = vpop.f32.mrb[0].mxu0
      %642 = vdwg.mxu0
      %v643 = vmul.f32 %v640, 0.57735026
      %v644 = vsel %vm465, %v643, -inf
      %645 = vmax.xlane.f32.xlu0 %v644
      %v646 = vpop.xlane.xlu0 %645
      %v647 = vsub.f32 %v643, %v646
      %v648 = vmul.f32 %v647, 1.442695
      %v649 = vpow.pop %v648
      %v650 = vsel %vm465, %v649, 0.0
      %651 = vadd.xlane.f32.xlu0 %v650
      %v652 = vpop.xlane.xlu0 %651
      %v653 = vrcp.pop %v652
      %v654 = vmul.f32 %v649, %v653
      %v656 = vsel %vm465, %v654, 0
      %658 = vmatprep.subr.mxu0 0.0
      %659 = vmatpush1.msra.mxu0 %v566
      %660 = vmatprep.subr.mxu0 0.0
      %661 = vmatpush1.msra.mxu0 0.0
      %662 = vmatprep.subr.mxu0 0.0
      %663 = vmatpush1.msra.mxu0 0.0
      %664 = vmatprep.subr.mxu0 0.0
      %665 = vmatpush1.msra.mxu0 0.0
      %666 = vmatprep.subr.mxu0 0.0
      %667 = vmatpush1.msra.mxu0 0.0
      %668 = vmatprep.subr.mxu0 0.0
      %669 = vmatpush1.msra.mxu0 0.0
      %670 = vmatprep.subr.mxu0 0.0
      %671 = vmatpush1.msra.mxu0 0.0
      %672 = vmatprep.subr.mxu0 0.0
      %673 = vmatpush1.msra.mxu0 0.0
      %674 = vmatprep.subr.mxu0 0.0
      %675 = vmatpush1.msra.mxu0 0.0
      %676 = vmatprep.subr.mxu0 0.0
      %677 = vmatpush1.msra.mxu0 0.0
      %678 = vmatprep.subr.mxu0 0.0
      %679 = vmatpush1.msra.mxu0 0.0
      %680 = vmatprep.subr.mxu0 0.0
      %681 = vmatpush1.msra.mxu0 0.0
      %682 = vmatprep.subr.mxu0 0.0
      %683 = vmatpush1.msra.mxu0 0.0
      %684 = vmatprep.subr.mxu0 0.0
      %685 = vmatpush1.msra.mxu0 0.0
      %686 = vmatprep.subr.mxu0 0.0
      %687 = vmatpush1.msra.mxu0 0.0
      %688 = vmatprep.subr.mxu0 0.0
      %689 = vmatpush1.msra.mxu0 0.0
      %690 = vmatprep.subr.mxu0 0.0
      %691 = vmatpush1.msra.mxu0 0.0
      %692 = vmatprep.subr.mxu0 0.0
      %693 = vmatpush1.msra.mxu0 0.0
      %694 = vmatprep.subr.mxu0 0.0
      %695 = vmatpush1.msra.mxu0 0.0
      %696 = vmatprep.subr.mxu0 0.0
      %697 = vmatpush1.msra.mxu0 0.0
      %698 = vmatprep.subr.mxu0 0.0
      %699 = vmatpush1.msra.mxu0 0.0
      %700 = vmatprep.subr.mxu0 0.0
      %701 = vmatpush1.msra.mxu0 0.0
      %702 = vmatprep.subr.mxu0 0.0
      %703 = vmatpush1.msra.mxu0 0.0
      %704 = vmatprep.subr.mxu0 0.0
      %705 = vmatpush1.msra.mxu0 0.0
      %706 = vmatprep.subr.mxu0 0.0
      %707 = vmatpush1.msra.mxu0 0.0
      %708 = vmatprep.subr.mxu0 0.0
      %709 = vmatpush1.msra.mxu0 0.0
      %710 = vmatprep.subr.mxu0 0.0
      %711 = vmatpush1.msra.mxu0 0.0
      %712 = vmatprep.subr.mxu0 0.0
      %713 = vmatpush1.msra.mxu0 0.0
      %714 = vmatprep.subr.mxu0 0.0
      %715 = vmatpush1.msra.mxu0 0.0
      %716 = vmatprep.subr.mxu0 0.0
      %717 = vmatpush1.msra.mxu0 0.0
      %718 = vmatprep.subr.mxu0 0.0
      %719 = vmatpush1.msra.mxu0 0.0
      %720 = vmatprep.subr.mxu0 0.0
      %721 = vmatpush1.msra.mxu0 0.0
      %722 = vmatprep.mubr.f32.mxu0 0.0
      %723 = vmatmul.mubr.f32.gmra.mrb[0].mxu0 %v656
      %v724 = vpop.f32.mrb[0].mxu0
      %v725 = vadd.f32 0.0, %v724
      %v726 = vpop.f32.mrb[0].mxu0
      %727 = vdwg.mxu0
      %728 = vst.msk [vmem:[#allocation5 + $0x4] sm:$0xf] %vm361, %v725
      %730 = vrot.lane.b32.xlu0 %v725, 3
      %v731 = vpop.permute.xlu0 %730
      %733 = vst.msk [vmem:[#allocation5] sm:$0xf0] %vm555, %v731
      %v734 = vld [vmem:[#allocation5] sm:$0xff]
      %v735 = vld [vmem:[%s3] sm:$0x3f]
      %v736 = vld [vmem:[%s4] sm:$0x1]
      %v738 = vlaneseq
      %v739 = vshrl.u32 %v738, 7
      %v740 = vsub.s32 0, %v739
      %v741 = vrot.slane %v736, %v740
      %v744 = vsel %vm283, %v734, 0
      %v747 = vsel %vm287, %v735, 0
      %749 = vmatprep.subr.mxu0 0.0
      %750 = vmatpush1.msra.mxu0 %v747
      %751 = vmatprep.subr.mxu0 0.0
      %752 = vmatpush1.msra.mxu0 0.0
      %753 = vmatprep.subr.mxu0 0.0
      %754 = vmatpush1.msra.mxu0 0.0
      %755 = vmatprep.subr.mxu0 0.0
      %756 = vmatpush1.msra.mxu0 0.0
      %757 = vmatprep.subr.mxu0 0.0
      %758 = vmatpush1.msra.mxu0 0.0
      %759 = vmatprep.subr.mxu0 0.0
      %760 = vmatpush1.msra.mxu0 0.0
      %761 = vmatprep.subr.mxu0 0.0
      %762 = vmatpush1.msra.mxu0 0.0
      %763 = vmatprep.subr.mxu0 0.0
      %764 = vmatpush1.msra.mxu0 0.0
      %765 = vmatprep.subr.mxu0 0.0
      %766 = vmatpush1.msra.mxu0 0.0
      %767 = vmatprep.subr.mxu0 0.0
      %768 = vmatpush1.msra.mxu0 0.0
      %769 = vmatprep.subr.mxu0 0.0
      %770 = vmatpush1.msra.mxu0 0.0
      %771 = vmatprep.subr.mxu0 0.0
      %772 = vmatpush1.msra.mxu0 0.0
      %773 = vmatprep.subr.mxu0 0.0
      %774 = vmatpush1.msra.mxu0 0.0
      %775 = vmatprep.subr.mxu0 0.0
      %776 = vmatpush1.msra.mxu0 0.0
      %777 = vmatprep.subr.mxu0 0.0
      %778 = vmatpush1.msra.mxu0 0.0
      %779 = vmatprep.subr.mxu0 0.0
      %780 = vmatpush1.msra.mxu0 0.0
      %781 = vmatprep.subr.mxu0 0.0
      %782 = vmatpush1.msra.mxu0 0.0
      %783 = vmatprep.subr.mxu0 0.0
      %784 = vmatpush1.msra.mxu0 0.0
      %785 = vmatprep.subr.mxu0 0.0
      %786 = vmatpush1.msra.mxu0 0.0
      %787 = vmatprep.subr.mxu0 0.0
      %788 = vmatpush1.msra.mxu0 0.0
      %789 = vmatprep.subr.mxu0 0.0
      %790 = vmatpush1.msra.mxu0 0.0
      %791 = vmatprep.subr.mxu0 0.0
      %792 = vmatpush1.msra.mxu0 0.0
      %793 = vmatprep.subr.mxu0 0.0
      %794 = vmatpush1.msra.mxu0 0.0
      %795 = vmatprep.subr.mxu0 0.0
      %796 = vmatpush1.msra.mxu0 0.0
      %797 = vmatprep.subr.mxu0 0.0
      %798 = vmatpush1.msra.mxu0 0.0
      %799 = vmatprep.subr.mxu0 0.0
      %800 = vmatpush1.msra.mxu0 0.0
      %801 = vmatprep.subr.mxu0 0.0
      %802 = vmatpush1.msra.mxu0 0.0
      %803 = vmatprep.subr.mxu0 0.0
      %804 = vmatpush1.msra.mxu0 0.0
      %805 = vmatprep.subr.mxu0 0.0
      %806 = vmatpush1.msra.mxu0 0.0
      %807 = vmatprep.subr.mxu0 0.0
      %808 = vmatpush1.msra.mxu0 0.0
      %809 = vmatprep.subr.mxu0 0.0
      %810 = vmatpush1.msra.mxu0 0.0
      %811 = vmatprep.subr.mxu0 0.0
      %812 = vmatpush1.msra.mxu0 0.0
      %813 = vmatprep.mubr.f32.mxu0 0.0
      %814 = vmatmul.mubr.f32.gmra.mrb[0].mxu0 %v744
      %v815 = vpop.f32.mrb[0].mxu0
      %v816 = vadd.f32 %v741, %v815
      %v817 = vpop.f32.mrb[0].mxu0
      %818 = vdwg.mxu0
      %v819 = vadd.f32 %v816, %v274
      %v820 = vsel %vm283, %v819, 0.0
      %821 = vadd.xlane.f32.xlu0 %v820
      %v822 = vpop.xlane.xlu0 %821
      %v823 = vrcp.pop 6.0
      %v824 = vmul.f32 %v822, %v823
      %v825 = vsub.f32 %v819, %v824
      %v826 = vmul.f32 %v825, %v825
      %v827 = vsel %vm283, %v826, 0.0
      %828 = vadd.xlane.f32.xlu0 %v827
      %v829 = vpop.xlane.xlu0 %828
      %v830 = vmul.f32 %v829, %v823
      %v831 = vadd.f32 %v830, 1e-05
      %v832 = vrsqrt.pop %v831
      %v833 = vmul.f32 %v825, %v832
      %v834 = vld [vmem:[%s5] sm:$0x1]
      %v836 = vlaneseq
      %v837 = vshrl.u32 %v836, 7
      %v838 = vsub.s32 0, %v837
      %v839 = vrot.slane %v834, %v838
      %v841 = vmul.f32 %v833, %v839
      %v842 = vld [vmem:[%s6] sm:$0x1]
      %v844 = vlaneseq
      %v845 = vshrl.u32 %v844, 7
      %v846 = vsub.s32 0, %v845
      %v847 = vrot.slane %v842, %v846
      %v849 = vadd.f32 %v841, %v847
      %850 = vst.msk [vmem:[%s273] sm:$0xff] %vm283, %v849
      %p851 = scmp.lt.s32.totalorder %s18, 1
      %s852 = scalar_select %p851, %s18, 1
      %s853 = smul.addr %s852, 8
      %s854 = scalar_lea.vmem %s7, %s853
      // Predicated region
      $region49: #{tpu_custom_call.1} parent=47 // pred_check
        %p855 = pneg %p188
      $region50: #{tpu_custom_call.1} parent=47 // pred_check_branch
        %857 = sbr.rel (%p855) target = $region52
      $region51: #{tpu_custom_call.1} parent=47 // pred_region
        _
      $region52: #{tpu_custom_call.1} parent=47 // pred_fallthru
        _
    $region48: #{tpu_custom_call.1} parent=5 // pred_fallthru
      _
    %p858 = scmp.le.s32.totalorder 2, %s13
    // Predicated region
    $region53: #{tpu_custom_call.1} parent=5 // pred_check
      %p859 = pneg %p858
    $region54: #{tpu_custom_call.1} parent=5 // pred_check_branch
      %861 = sbr.rel (%p859) target = $region56
    $region55: #{tpu_custom_call.1} parent=5 // pred_region
      %s862 = ssub.s32 %s13, 2
      // Predicated region
      $region57: #{tpu_custom_call.1} parent=55 // pred_check
        %p863 = pneg %p194
      $region58: #{tpu_custom_call.1} parent=55 // pred_check_branch
        %865 = sbr.rel (%p863) target = $region60
      $region59: #{tpu_custom_call.1} parent=55 // pred_region
        %p866 = scmp.lt.s32.totalorder %s19, 1
        %s867 = scalar_select %p866, %s19, 1
        %s868 = smul.addr %s867, 8
        %s869 = scalar_lea.vmem %s7, %s868
      $region60: #{tpu_custom_call.1} parent=55 // pred_fallthru
        _
    $region56: #{tpu_custom_call.1} parent=5 // pred_fallthru
      _
  $region6: #{tpu_custom_call.1} parent=0 // loop_footer
    %s17 = sadd.s32 1, %s13
  $region7: #{tpu_custom_call.1} parent=0 // loop_footer_branch
    %12 = sbr.rel target = $region3
  $region8: #{tpu_custom_call.1} parent=0 // loop_exit
    _

</llo_original>
